<compile_context>
chip_gen: v5e
topology: v5e:2x2
jax: 0.10.0
libtpu: 0.0.40
codegen_flags: <defaults>
</compile_context>

<pallas_src>
import math

import jax
import jax.numpy as jnp
from jax.experimental import pallas as pl
from jax.experimental.pallas import tpu as pltpu

_LANE = 128


def _sublane_multiple(dtype) -> int:
    itemsize = jnp.dtype(dtype).itemsize
    return {4: 8, 2: 16, 1: 32}.get(itemsize, 8)


def _round_up(x: int, m: int) -> int:
    return ((x + m - 1) // m) * m


def _generation_params():
    """(block_bytes, vmem_limit_bytes, ensure_two_grid_steps) per TPU generation."""
    kind = ""
    try:
        kind = jax.devices()[0].device_kind.lower()
    except Exception:
        pass
    if "v5 lite" in kind or "v5lite" in kind or "v5e" in kind:
        # v5e: 16 MiB scoped-VMEM default -> 2 MiB blocks (~8-9 MiB resident).
        return 2 << 20, None, False
    if "v6" in kind:
        # v6e: 4 MiB blocks; make the scoped-VMEM budget explicit (128 MiB phys).
        return 4 << 20, 64 << 20, False
    if "v7" in kind or "7x" in kind:
        # v7x: 4 MiB blocks (~16 MiB resident < 32 MiB scoped / 64 MiB phys);
        # make sure both TensorCores get at least one grid step each.
        return 4 << 20, None, True
    # Unknown generation (v4/v5p/interpret): conservative defaults.
    return 2 << 20, None, False


def build_positional_encoding(tensor_dimensions: int, max_length: int) -> jnp.ndarray:
    """Deterministic sinusoidal table, identical to the PyTorch __init__ buffer."""
    position = jnp.arange(0, max_length, dtype=jnp.float32)[:, None]          # (L, 1)
    divisor = jnp.exp(
        jnp.arange(0, tensor_dimensions, 2, dtype=jnp.float32)
        * -(math.log(10000.0) / tensor_dimensions)
    )                                                                           # (ceil(D/2),)
    angles = position * divisor                                                 # (L, ceil(D/2))
    pe = jnp.zeros((max_length, tensor_dimensions), dtype=jnp.float32)
    pe = pe.at[:, 0::2].set(jnp.sin(angles))
    # Handle odd d_model gracefully (cos slots = floor(D/2) columns).
    pe = pe.at[:, 1::2].set(jnp.cos(angles[:, : tensor_dimensions // 2]))
    return pe                                                                   # (L, D)


def _pe_add_kernel(x_ref, pe_ref, o_ref):
    # mode A: x (tB, tC),          pe (1, tC)   -> sublane broadcast
    # mode B: x (tBatch, tS, tC),  pe (tS, tC)  -> leading-dim broadcast
    # Cast back to the output dtype so bf16 I/O stays narrow end-to-end.
    o_ref[...] = (x_ref[...] + pe_ref[...]).astype(o_ref.dtype)


class PallasPositionalEncoder:
    """JAX/Pallas equivalent of the PyTorch PositionalEncoder module."""

    def __init__(self, tensor_dimensions: int, max_length: int):
        self.d_model = int(tensor_dimensions)
        self.max_length = int(max_length)
        self.pe = build_positional_encoding(tensor_dimensions, max_length)  # f32 (L, D)
        self._cache = {}  # (B, S, dtype, donate) -> (pe_slab, compiled forward fn)

    # ------------------------------------------------------------------ build
    def _build(self, B, S, D, dtype, donate_x):
        itemsize = jnp.dtype(dtype).itemsize
        sub = _sublane_multiple(dtype)
        block_bytes, vmem_limit, two_steps = _generation_params()
        N = S * D

        # Small batch (< sublane multiple): fold part of S onto the sublane axis
        # while keeping the lane axis a multiple of 128.  pe stays un-expanded.
        s_fold = 1
        if B < sub and S > 1:
            candidates = [f for f in range(2, S + 1)
                          if S % f == 0 and ((S // f) * D) % _LANE == 0]
            if candidates:
                geq = [f for f in candidates if f >= sub]
                s_fold = min(geq) if geq else max(candidates)

        pe_sliced = self.pe[:S, :]  # hoisted: done once per cache entry, not per call

        if s_fold == 1:
            # ------------- mode A: (B, S*D) lane-dense slab, batch on sublanes
            pe_slab = pe_sliced.reshape(1, N).astype(dtype)
            R = B
            tB = R if R <= 256 else 256  # full dim or a multiple of 8/16/32
            col_budget = max(_LANE, (block_bytes // (itemsize * tB)) // _LANE * _LANE)
            tC = N if N <= col_budget else col_budget
            if two_steps and pl.cdiv(N, tC) * pl.cdiv(R, tB) < 2:
                if N >= 2 * _LANE:
                    tC = _round_up(-(-N // 2), _LANE)
                elif R >= 2 * sub:
                    tB = _round_up(-(-R // 2), sub)
            grid = (pl.cdiv(N, tC), pl.cdiv(R, tB))     # batch axis innermost
            in_specs = [
                pl.BlockSpec((tB, tC), lambda c, b: (b, c)),   # x tile
                pl.BlockSpec((1, tC), lambda c, b: (0, c)),    # pe (batch-invariant)
            ]
            out_spec = pl.BlockSpec((tB, tC), lambda c, b: (b, c))
            out_shape = jax.ShapeDtypeStruct((R, N), dtype)
            semantics = ("parallel", "parallel")
            x_view = (R, N)
        else:
            # ------------- mode B: (B, s_fold, C); seq-fold rows on sublanes
            C = (S // s_fold) * D
            pe_slab = pe_sliced.reshape(s_fold, C).astype(dtype)
            tS = s_fold if s_fold <= 256 else 256
            col_budget = max(_LANE, (block_bytes // (itemsize * tS)) // _LANE * _LANE)
            tC = C if C <= col_budget else col_budget
            blk = tS * tC * itemsize
            tBatch = max(1, min(B, block_bytes // max(1, blk)))
            if two_steps and pl.cdiv(C, tC) * pl.cdiv(s_fold, tS) * pl.cdiv(B, tBatch) < 2:
                if B >= 2:
                    tBatch = -(-B // 2)
                elif C >= 2 * _LANE:
                    tC = _round_up(-(-C // 2), _LANE)
                elif s_fold >= 2 * sub:
                    tS = _round_up(-(-s_fold // 2), sub)
            grid = (pl.cdiv(C, tC), pl.cdiv(s_fold, tS), pl.cdiv(B, tBatch))
            in_specs = [
                pl.BlockSpec((tBatch, tS, tC), lambda c, s, b: (b, s, c)),  # x tile
                pl.BlockSpec((tS, tC), lambda c, s, b: (s, c)),             # pe (batch-invariant)
            ]
            out_spec = pl.BlockSpec((tBatch, tS, tC), lambda c, s, b: (b, s, c))
            out_shape = jax.ShapeDtypeStruct((B, s_fold, C), dtype)
            semantics = ("parallel", "parallel", "parallel")
            x_view = (B, s_fold, C)

        pcall = pl.pallas_call(
            _pe_add_kernel,
            out_shape=out_shape,
            grid_spec=pltpu.PrefetchScalarGridSpec(
                num_scalar_prefetch=0,
                grid=grid,
                in_specs=in_specs,
                out_specs=out_spec,
            ),
            compiler_params=pltpu.CompilerParams(
                dimension_semantics=semantics,
                vmem_limit_bytes=vmem_limit,
            ),
            # x (input 0) aliases the output when the caller donates its buffer.
            input_output_aliases=({0: 0} if donate_x else {}),
        )

        def fwd(x_full, pe_s):
            return pcall(x_full.reshape(x_view), pe_s).reshape(B, S, D)

        call_fn = jax.jit(fwd, donate_argnums=((0,) if donate_x else ()))
        return pe_slab, call_fn

    # ------------------------------------------------------------------ call
    def __call__(self, x: jnp.ndarray, *, donate_x: bool = False) -> jnp.ndarray:
        B, S, D = x.shape
        assert D == self.d_model, f"d_model mismatch: {D} vs {self.d_model}"
        assert S <= self.max_length, f"seq_len {S} exceeds max_length {self.max_length}"
        key = (B, S, str(jnp.dtype(x.dtype)), bool(donate_x))
        if key not in self._cache:
            self._cache[key] = self._build(B, S, D, x.dtype, donate_x)
        pe_slab, call_fn = self._cache[key]
        return call_fn(x, pe_slab)


if __name__ == "__main__":
    # Small shapes consistent with the module: batch=2, seq=8, d_model=32.
    B, S, D = 2, 8, 32
    MAX_LENGTH = 64

    key = jax.random.PRNGKey(0)
    x = jax.random.normal(key, (B, S, D), dtype=jnp.float32)

    enc = PallasPositionalEncoder(tensor_dimensions=D, max_length=MAX_LENGTH)

    # f32 path (matches the PyTorch module; small batch -> mode B fold layout).
    out = jax.block_until_ready(enc(x))
    ref = x + enc.pe[None, :S, :]
    assert out.shape == (B, S, D)
    assert jnp.allclose(out, ref, atol=1e-6, rtol=1e-6)

    # bf16 path: reduced-precision I/O, add performed in bf16 inside the kernel.
    x_bf16 = x.astype(jnp.bfloat16)
    out_bf16 = jax.block_until_ready(enc(x_bf16))
    ref_bf16 = x_bf16 + enc.pe[:S, :].astype(jnp.bfloat16)[None]
    assert out_bf16.dtype == jnp.bfloat16
    assert jnp.allclose(out_bf16.astype(jnp.float32), ref_bf16.astype(jnp.float32),
                        atol=2e-2, rtol=2e-2)

    # Batch >= 8 exercises the lane-dense (B, S*D) mode A layout.
    x_big = jax.random.normal(jax.random.PRNGKey(1), (16, S, D), dtype=jnp.float32)
    out_big = jax.block_until_ready(enc(x_big))
    assert jnp.allclose(out_big, x_big + enc.pe[None, :S, :], atol=1e-6, rtol=1e-6)

    print("KERNEL_OK")
</pallas_src>

<mosaic_0001>
module attributes {stable_mosaic.version = 11 : i64} {
  func.func @_pe_add_kernel(%arg0: i32, %arg1: i32, %arg2: i32, %arg3: memref<2x2x128xf32, #tpu.memory_space<vmem>>, %arg4: memref<2x128xf32, #tpu.memory_space<vmem>>, %arg5: memref<2x2x128xf32, #tpu.memory_space<vmem>>) attributes {dimension_semantics = [#tpu.dimension_semantics<parallel>, #tpu.dimension_semantics<parallel>, #tpu.dimension_semantics<parallel>], iteration_bounds = array<i64: 1, 1, 1>, scalar_prefetch = 0 : i64, scratch_operands = 0 : i64, tpu.core_type = #tpu.core_type<tc>, window_params = [{transform_indices = @transform_0, window_bounds = array<i64: 2, 2, 128>}, {transform_indices = @transform_1, window_bounds = array<i64: 2, 128>}, {transform_indices = @transform_2, window_bounds = array<i64: 2, 2, 128>}]} {
    %c0 = arith.constant 0 : index
    %c0_0 = arith.constant 0 : index
    %c0_1 = arith.constant 0 : index
    %0 = vector.load %arg3[%c0, %c0_0, %c0_1] : memref<2x2x128xf32, #tpu.memory_space<vmem>>, vector<2x2x128xf32>
    %c0_2 = arith.constant 0 : index
    %c0_3 = arith.constant 0 : index
    %1 = vector.load %arg4[%c0_2, %c0_3] : memref<2x128xf32, #tpu.memory_space<vmem>>, vector<2x128xf32>
    %2 = vector.shape_cast %1 : vector<2x128xf32> to vector<1x2x128xf32>
    %3 = vector.broadcast %2 : vector<1x2x128xf32> to vector<2x2x128xf32>
    %4 = arith.addf %0, %3 : vector<2x2x128xf32>
    %c0_4 = arith.constant 0 : index
    %c0_5 = arith.constant 0 : index
    %c0_6 = arith.constant 0 : index
    %5 = vector.load %arg5[%c0_4, %c0_5, %c0_6] : memref<2x2x128xf32, #tpu.memory_space<vmem>>, vector<2x2x128xf32>
    tpu.vector_store %arg5[%c0_4, %c0_5, %c0_6], %4 {strides = array<i32>} : memref<2x2x128xf32, #tpu.memory_space<vmem>>, vector<2x2x128xf32>,
    return
  }
  func.func @transform_0(%arg0: i32, %arg1: i32, %arg2: i32) -> (i32, i32, i32) {
    %c0_i32 = arith.constant 0 : i32
    return %arg2, %arg1, %arg0 : i32, i32, i32
  }
  func.func @transform_1(%arg0: i32, %arg1: i32, %arg2: i32) -> (i32, i32) {
    %c0_i32 = arith.constant 0 : i32
    return %arg1, %arg0 : i32, i32
  }
  func.func @transform_2(%arg0: i32, %arg1: i32, %arg2: i32) -> (i32, i32, i32) {
    %c0_i32 = arith.constant 0 : i32
    return %arg2, %arg1, %arg0 : i32, i32, i32
  }
}

</mosaic_0001>

<llo_original>
// kernel: fwd.1
$region0: #{fwd.1}
  #allocation0 [shape = 'u32[]', space=smem, size = 0x4, offset = 0x4, fixed_abs, tag = 'smem constant byte address 0x4 - core index']
  #allocation1 [shape = 'u32[72,128]{1,0:T(1,128)}', space=vmem, size = 0x9000, scoped, tag = 'internal scratch']
  %s0 = inlined_call_operand.vmem [shape: f32[2,2,128], index: 0, kind: input, shape index: {}]
  %s1 = inlined_call_operand.vmem [shape: f32[2,128], index: 1, kind: input, shape index: {}]
  %s2 = inlined_call_operand.vmem [shape: f32[2,2,128], index: 2, kind: output, shape index: {}]
  %s3 = sld [smem:[#allocation0]]
  $region18: #{fwd.1} parent=0
    _
  %s5 = ssub.s32 1, %s3
  %s6 = scalar_select 0, %s5, %s3
  // Predicated region
  $region2: #{fwd.1} parent=0 // pred_check
    _
  $region3: #{fwd.1} parent=0 // pred_check_branch
    %8 = sbr.rel (0) target = $region5
  $region4: #{fwd.1} parent=0 // pred_region
    _
  $region5: #{fwd.1} parent=0 // pred_fallthru
    _
  // Predicated region
  $region6: #{fwd.1} parent=0 // pred_check
    _
  $region7: #{fwd.1} parent=0 // pred_check_branch
    %10 = sbr.rel (0) target = $region9
  $region8: #{fwd.1} parent=0 // pred_region
    _
  $region9: #{fwd.1} parent=0 // pred_fallthru
    _
  %v11 = vld [vmem:[%s0] sm:$0x3]
  %v12 = vld [vmem:[%s0 + $0x2] sm:$0x3]
  %v13 = vld [vmem:[%s1] sm:$0x3]
  %v14 = vadd.f32 %v11, %v13
  %v15 = vadd.f32 %v12, %v13
  %16 = vst [vmem:[%s2] sm:$0x3] %v14
  %17 = vst [vmem:[%s2 + $0x2] sm:$0x3] %v15
  // Predicated region
  $region10: #{fwd.1} parent=0 // pred_check
    _
  $region11: #{fwd.1} parent=0 // pred_check_branch
    %19 = sbr.rel (0) target = $region13
  $region12: #{fwd.1} parent=0 // pred_region
    _
  $region13: #{fwd.1} parent=0 // pred_fallthru
    _
  // Predicated region
  $region14: #{fwd.1} parent=0 // pred_check
    _
  $region15: #{fwd.1} parent=0 // pred_check_branch
    %21 = sbr.rel (0) target = $region17
  $region16: #{fwd.1} parent=0 // pred_region
    _
  $region17: #{fwd.1} parent=0 // pred_fallthru
    _

</llo_original>
